<compile_context>
chip_gen: v7x
topology: tpu7x:2x2x1
jax: 0.10.0
libtpu: 0.0.40
codegen_flags: <defaults>
</compile_context>

<pallas_src>
import functools

import jax
import jax.numpy as jnp
from jax.experimental import pallas as pl
from jax.experimental.pallas import tpu as pltpu

P_DROPOUT = 0.2          # module constant referenced by the PyTorch model
NEG_SLOPE = 0.01         # nn.LeakyReLU default negative_slope
_DIMS = [(8, 60), (60, 60), (60, 30), (30, 1)]   # (in_features, out_features)


def _round_up(n, m):
    return ((n + m - 1) // m) * m


def _leaky_relu(x):
    return jnp.where(x >= 0, x, NEG_SLOPE * x)


def _make_kernel(training: bool):
    """Kernel operates on feature-major tiles: x_ref is (8, TILE_B), weights are
    PyTorch-layout (out, in), biases (out, 1), output (1, TILE_B)."""
    if training:
        def kernel(x_ref, w1, b1, w2, b2, w3, b3, w4, b4, m1, m2, m3, o_ref):
            h = _leaky_relu(
                jnp.dot(w1[...], x_ref[...], preferred_element_type=jnp.float32)
                + b1[...]) * m1[...]
            h = _leaky_relu(
                jnp.dot(w2[...], h, preferred_element_type=jnp.float32)
                + b2[...]) * m2[...]
            h = _leaky_relu(
                jnp.dot(w3[...], h, preferred_element_type=jnp.float32)
                + b3[...]) * m3[...]
            out = jnp.dot(w4[...], h, preferred_element_type=jnp.float32) + b4[...]
            o_ref[...] = out.astype(o_ref.dtype)
    else:
        def kernel(x_ref, w1, b1, w2, b2, w3, b3, w4, b4, o_ref):
            h = _leaky_relu(
                jnp.dot(w1[...], x_ref[...], preferred_element_type=jnp.float32)
                + b1[...])
            h = _leaky_relu(
                jnp.dot(w2[...], h, preferred_element_type=jnp.float32)
                + b2[...])
            h = _leaky_relu(
                jnp.dot(w3[...], h, preferred_element_type=jnp.float32)
                + b3[...])
            out = jnp.dot(w4[...], h, preferred_element_type=jnp.float32) + b4[...]
            o_ref[...] = out.astype(o_ref.dtype)
    return kernel


@functools.partial(jax.jit, static_argnames=("training",))
def deepnet_forward(x, params, dropout_key, *, training=False):
    """x: (B, 8) float32.  params: w{i} of shape (out, in), b{i} of shape (out, 1).
    Returns (B, 1) float32.  dropout_key is only consumed when training=True."""
    B = x.shape[0]
    tile_b = min(2048, _round_up(B, 128))      # lane-dense batch tile
    padded_B = _round_up(B, tile_b)
    grid = (padded_B // tile_b,)

    # Feature-major, lane-dense input: (8, padded_B), zero-padded batch tail.
    x_t = jnp.zeros((8, padded_B), jnp.float32).at[:, :B].set(
        x.astype(jnp.float32).T)

    def const_spec(shape):
        return pl.BlockSpec(shape, lambda i: (0, 0))      # resident in VMEM

    def tiled_spec(rows):
        return pl.BlockSpec((rows, tile_b), lambda i: (0, i))

    in_specs = [tiled_spec(8)]
    args = [x_t]
    for li, (fin, fout) in enumerate(_DIMS, start=1):
        in_specs += [const_spec((fout, fin)), const_spec((fout, 1))]
        args += [params[f"w{li}"], params[f"b{li}"]]

    if training:
        # Inverted-dropout scale masks (0 or 1/(1-p)), generated host/XLA-side.
        scale = 1.0 / (1.0 - P_DROPOUT)
        keys = jax.random.split(dropout_key, 3)
        for k, fout in zip(keys, (60, 60, 30)):
            keep = jax.random.bernoulli(k, 1.0 - P_DROPOUT, (fout, padded_B))
            args.append(jnp.where(keep, scale, 0.0).astype(jnp.float32))
            in_specs.append(tiled_spec(fout))

    out = pl.pallas_call(
        _make_kernel(training),
        grid=grid,
        in_specs=in_specs,
        out_specs=pl.BlockSpec((1, tile_b), lambda i: (0, i)),
        out_shape=jax.ShapeDtypeStruct((1, padded_B), jnp.float32),
        compiler_params=pltpu.CompilerParams(
            dimension_semantics=("parallel",)),
    )(*args)

    # (1, padded_B) lane-dense slab -> (B, 1), matching the PyTorch output.
    return out[0, :B].reshape(B, 1)


def init_params(key):
    """PyTorch nn.Linear default init: U[-1/sqrt(fan_in), 1/sqrt(fan_in)].
    Weights stored PyTorch-style as (out_features, in_features); biases (out, 1)."""
    params = {}
    for i, (fan_in, fan_out) in enumerate(_DIMS, start=1):
        key, kw, kb = jax.random.split(key, 3)
        bound = 1.0 / (fan_in ** 0.5)
        params[f"w{i}"] = jax.random.uniform(
            kw, (fan_out, fan_in), jnp.float32, minval=-bound, maxval=bound)
        params[f"b{i}"] = jax.random.uniform(
            kb, (fan_out, 1), jnp.float32, minval=-bound, maxval=bound)
    return params


def ref_forward(x, params):
    """Pure-JAX reference for the eval path (dropout = identity)."""
    h = x
    for i in range(1, 4):
        h = h @ params[f"w{i}"].T + params[f"b{i}"][:, 0]
        h = jnp.where(h >= 0, h, NEG_SLOPE * h)
    return h @ params["w4"].T + params["b4"][:, 0]


if __name__ == "__main__":
    key = jax.random.PRNGKey(0)
    kx, kp, kd = jax.random.split(key, 3)

    batch = 256
    x = jax.random.normal(kx, (batch, 8), dtype=jnp.float32)
    params = init_params(kp)

    # Eval-mode forward (dropout = identity), same semantics as model.eval().
    y = deepnet_forward(x, params, kd, training=False)
    jax.block_until_ready(y)
    assert y.shape == (batch, 1)

    y_ref = ref_forward(x, params).reshape(batch, 1)
    assert jnp.allclose(y, y_ref, atol=1e-5, rtol=1e-5), (
        float(jnp.max(jnp.abs(y - y_ref))))

    # Exercise the training (dropout) path once to make sure it lowers and runs.
    y_train = deepnet_forward(x, params, kd, training=True)
    jax.block_until_ready(y_train)
    assert y_train.shape == (batch, 1)
    assert bool(jnp.all(jnp.isfinite(y_train)))

    print("KERNEL_OK")
</pallas_src>

<mosaic_0001>
module attributes {stable_mosaic.version = 11 : i64} {
  func.func @kernel(%arg0: i32, %arg1: memref<8x256xf32, #tpu.memory_space<vmem>>, %arg2: memref<60x8xf32, #tpu.memory_space<vmem>>, %arg3: memref<60x1xf32, #tpu.memory_space<vmem>>, %arg4: memref<60x60xf32, #tpu.memory_space<vmem>>, %arg5: memref<60x1xf32, #tpu.memory_space<vmem>>, %arg6: memref<30x60xf32, #tpu.memory_space<vmem>>, %arg7: memref<30x1xf32, #tpu.memory_space<vmem>>, %arg8: memref<1x30xf32, #tpu.memory_space<vmem>>, %arg9: memref<1x1xf32, #tpu.memory_space<vmem>>, %arg10: memref<1x256xf32, #tpu.memory_space<vmem>>) attributes {dimension_semantics = [#tpu.dimension_semantics<parallel>], iteration_bounds = array<i64: 1>, scalar_prefetch = 0 : i64, scratch_operands = 0 : i64, tpu.core_type = #tpu.core_type<tc>, window_params = [{transform_indices = @transform_0, window_bounds = array<i64: 8, 256>}, {pipeline_mode = #tpu.pipeline_mode<synchronous>, transform_indices = @transform_1, window_bounds = array<i64: 60, 8>}, {pipeline_mode = #tpu.pipeline_mode<synchronous>, transform_indices = @transform_2, window_bounds = array<i64: 60, 1>}, {pipeline_mode = #tpu.pipeline_mode<synchronous>, transform_indices = @transform_3, window_bounds = array<i64: 60, 60>}, {pipeline_mode = #tpu.pipeline_mode<synchronous>, transform_indices = @transform_4, window_bounds = array<i64: 60, 1>}, {pipeline_mode = #tpu.pipeline_mode<synchronous>, transform_indices = @transform_5, window_bounds = array<i64: 30, 60>}, {pipeline_mode = #tpu.pipeline_mode<synchronous>, transform_indices = @transform_6, window_bounds = array<i64: 30, 1>}, {pipeline_mode = #tpu.pipeline_mode<synchronous>, transform_indices = @transform_7, window_bounds = array<i64: 1, 30>}, {pipeline_mode = #tpu.pipeline_mode<synchronous>, transform_indices = @transform_8, window_bounds = array<i64: 1, 1>}, {transform_indices = @transform_9, window_bounds = array<i64: 1, 256>}]} {
    %c0 = arith.constant 0 : index
    %c0_0 = arith.constant 0 : index
    %0 = vector.load %arg2[%c0, %c0_0] : memref<60x8xf32, #tpu.memory_space<vmem>>, vector<60x8xf32>
    %c0_1 = arith.constant 0 : index
    %c0_2 = arith.constant 0 : index
    %1 = vector.load %arg1[%c0_1, %c0_2] : memref<8x256xf32, #tpu.memory_space<vmem>>, vector<8x256xf32>
    %cst = arith.constant dense<0.000000e+00> : vector<60x256xf32>
    %2 = tpu.matmul %0, %1, %cst {dimension_numbers = #tpu.dot_dimension_numbers<[1], [0], [0], [1], [0, 0, 1, 1], [], []>} : vector<60x8xf32>, vector<8x256xf32>, vector<60x256xf32> -> vector<60x256xf32>
    %c0_3 = arith.constant 0 : index
    %c0_4 = arith.constant 0 : index
    %3 = vector.load %arg3[%c0_3, %c0_4] : memref<60x1xf32, #tpu.memory_space<vmem>>, vector<60x1xf32>
    %4 = vector.broadcast %3 : vector<60x1xf32> to vector<60x256xf32>
    %5 = arith.addf %2, %4 : vector<60x256xf32>
    %cst_5 = arith.constant 0.000000e+00 : f32
    %6 = vector.broadcast %cst_5 : f32 to vector<60x256xf32>
    %7 = arith.cmpf oge, %5, %6 : vector<60x256xf32>
    %cst_6 = arith.constant 0.00999999977 : f32
    %8 = vector.broadcast %cst_6 : f32 to vector<60x256xf32>
    %9 = arith.mulf %8, %5 : vector<60x256xf32>
    %10 = arith.select %7, %5, %9 : vector<60x256xi1>, vector<60x256xf32>
    %c0_7 = arith.constant 0 : index
    %c0_8 = arith.constant 0 : index
    %11 = vector.load %arg4[%c0_7, %c0_8] : memref<60x60xf32, #tpu.memory_space<vmem>>, vector<60x60xf32>
    %cst_9 = arith.constant dense<0.000000e+00> : vector<60x256xf32>
    %12 = tpu.matmul %11, %10, %cst_9 {dimension_numbers = #tpu.dot_dimension_numbers<[1], [0], [0], [1], [0, 0, 1, 1], [], []>} : vector<60x60xf32>, vector<60x256xf32>, vector<60x256xf32> -> vector<60x256xf32>
    %c0_10 = arith.constant 0 : index
    %c0_11 = arith.constant 0 : index
    %13 = vector.load %arg5[%c0_10, %c0_11] : memref<60x1xf32, #tpu.memory_space<vmem>>, vector<60x1xf32>
    %14 = vector.broadcast %13 : vector<60x1xf32> to vector<60x256xf32>
    %15 = arith.addf %12, %14 : vector<60x256xf32>
    %cst_12 = arith.constant 0.000000e+00 : f32
    %16 = vector.broadcast %cst_12 : f32 to vector<60x256xf32>
    %17 = arith.cmpf oge, %15, %16 : vector<60x256xf32>
    %cst_13 = arith.constant 0.00999999977 : f32
    %18 = vector.broadcast %cst_13 : f32 to vector<60x256xf32>
    %19 = arith.mulf %18, %15 : vector<60x256xf32>
    %20 = arith.select %17, %15, %19 : vector<60x256xi1>, vector<60x256xf32>
    %c0_14 = arith.constant 0 : index
    %c0_15 = arith.constant 0 : index
    %21 = vector.load %arg6[%c0_14, %c0_15] : memref<30x60xf32, #tpu.memory_space<vmem>>, vector<30x60xf32>
    %cst_16 = arith.constant dense<0.000000e+00> : vector<30x256xf32>
    %22 = tpu.matmul %21, %20, %cst_16 {dimension_numbers = #tpu.dot_dimension_numbers<[1], [0], [0], [1], [0, 0, 1, 1], [], []>} : vector<30x60xf32>, vector<60x256xf32>, vector<30x256xf32> -> vector<30x256xf32>
    %c0_17 = arith.constant 0 : index
    %c0_18 = arith.constant 0 : index
    %23 = vector.load %arg7[%c0_17, %c0_18] : memref<30x1xf32, #tpu.memory_space<vmem>>, vector<30x1xf32>
    %24 = vector.broadcast %23 : vector<30x1xf32> to vector<30x256xf32>
    %25 = arith.addf %22, %24 : vector<30x256xf32>
    %cst_19 = arith.constant 0.000000e+00 : f32
    %26 = vector.broadcast %cst_19 : f32 to vector<30x256xf32>
    %27 = arith.cmpf oge, %25, %26 : vector<30x256xf32>
    %cst_20 = arith.constant 0.00999999977 : f32
    %28 = vector.broadcast %cst_20 : f32 to vector<30x256xf32>
    %29 = arith.mulf %28, %25 : vector<30x256xf32>
    %30 = arith.select %27, %25, %29 : vector<30x256xi1>, vector<30x256xf32>
    %c0_21 = arith.constant 0 : index
    %c0_22 = arith.constant 0 : index
    %31 = vector.load %arg8[%c0_21, %c0_22] : memref<1x30xf32, #tpu.memory_space<vmem>>, vector<1x30xf32>
    %cst_23 = arith.constant dense<0.000000e+00> : vector<1x256xf32>
    %32 = tpu.matmul %31, %30, %cst_23 {dimension_numbers = #tpu.dot_dimension_numbers<[1], [0], [0], [1], [0, 0, 1, 1], [], []>} : vector<1x30xf32>, vector<30x256xf32>, vector<1x256xf32> -> vector<1x256xf32>
    %c0_24 = arith.constant 0 : index
    %c0_25 = arith.constant 0 : index
    %33 = vector.load %arg9[%c0_24, %c0_25] : memref<1x1xf32, #tpu.memory_space<vmem>>, vector<1x1xf32>
    %34 = vector.broadcast %33 : vector<1x1xf32> to vector<1x256xf32>
    %35 = arith.addf %32, %34 : vector<1x256xf32>
    %c0_26 = arith.constant 0 : index
    %c0_27 = arith.constant 0 : index
    %36 = vector.load %arg10[%c0_26, %c0_27] : memref<1x256xf32, #tpu.memory_space<vmem>>, vector<1x256xf32>
    tpu.vector_store %arg10[%c0_26, %c0_27], %35 {strides = array<i32>} : memref<1x256xf32, #tpu.memory_space<vmem>>, vector<1x256xf32>,
    return
  }
  func.func @transform_0(%arg0: i32) -> (i32, i32) {
    %c0_i32 = arith.constant 0 : i32
    %c0_i32_0 = arith.constant 0 : i32
    return %c0_i32, %arg0 : i32, i32
  }
  func.func @transform_1(%arg0: i32) -> (i32, i32) {
    %c0_i32 = arith.constant 0 : i32
    %c0_i32_0 = arith.constant 0 : i32
    %c0_i32_1 = arith.constant 0 : i32
    return %c0_i32, %c0_i32_0 : i32, i32
  }
  func.func @transform_2(%arg0: i32) -> (i32, i32) {
    %c0_i32 = arith.constant 0 : i32
    %c0_i32_0 = arith.constant 0 : i32
    %c0_i32_1 = arith.constant 0 : i32
    return %c0_i32, %c0_i32_0 : i32, i32
  }
  func.func @transform_3(%arg0: i32) -> (i32, i32) {
    %c0_i32 = arith.constant 0 : i32
    %c0_i32_0 = arith.constant 0 : i32
    %c0_i32_1 = arith.constant 0 : i32
    return %c0_i32, %c0_i32_0 : i32, i32
  }
  func.func @transform_4(%arg0: i32) -> (i32, i32) {
    %c0_i32 = arith.constant 0 : i32
    %c0_i32_0 = arith.constant 0 : i32
    %c0_i32_1 = arith.constant 0 : i32
    return %c0_i32, %c0_i32_0 : i32, i32
  }
  func.func @transform_5(%arg0: i32) -> (i32, i32) {
    %c0_i32 = arith.constant 0 : i32
    %c0_i32_0 = arith.constant 0 : i32
    %c0_i32_1 = arith.constant 0 : i32
    return %c0_i32, %c0_i32_0 : i32, i32
  }
  func.func @transform_6(%arg0: i32) -> (i32, i32) {
    %c0_i32 = arith.constant 0 : i32
    %c0_i32_0 = arith.constant 0 : i32
    %c0_i32_1 = arith.constant 0 : i32
    return %c0_i32, %c0_i32_0 : i32, i32
  }
  func.func @transform_7(%arg0: i32) -> (i32, i32) {
    %c0_i32 = arith.constant 0 : i32
    %c0_i32_0 = arith.constant 0 : i32
    %c0_i32_1 = arith.constant 0 : i32
    return %c0_i32, %c0_i32_0 : i32, i32
  }
  func.func @transform_8(%arg0: i32) -> (i32, i32) {
    %c0_i32 = arith.constant 0 : i32
    %c0_i32_0 = arith.constant 0 : i32
    %c0_i32_1 = arith.constant 0 : i32
    return %c0_i32, %c0_i32_0 : i32, i32
  }
  func.func @transform_9(%arg0: i32) -> (i32, i32) {
    %c0_i32 = arith.constant 0 : i32
    %c0_i32_0 = arith.constant 0 : i32
    return %c0_i32, %arg0 : i32, i32
  }
}

</mosaic_0001>

<llo_original>
// kernel: deepnet_forward.1
$region0: #{deepnet_forward.1}
  #allocation0 [shape = 'u32[]', space=smem, size = 0x4, offset = 0x4, fixed_abs, tag = 'smem constant byte address 0x4 - core index']
  #allocation1 [shape = 'u32[144,128]{1,0:T(1,128)}', space=vmem, size = 0x12000, scoped, tag = 'internal scratch']
  #allocation2 [shape = 'f32[1,1]{1,0:T(1,128)S(1)}', space=vmem, size = 0x200, scoped, tag = 'scoped memory for deepnet_forward.1']
  %s0 = inlined_call_operand.vmem [shape: f32[8,256], index: 0, kind: input, shape index: {}]
  %s1 = inlined_call_operand.vmem [shape: f32[60,8], index: 1, kind: input, shape index: {}]
  %s2 = inlined_call_operand.vmem [shape: f32[60,1], index: 2, kind: input, shape index: {}]
  %s3 = inlined_call_operand.vmem [shape: f32[60,60], index: 3, kind: input, shape index: {}]
  %s4 = inlined_call_operand.vmem [shape: f32[60,1], index: 4, kind: input, shape index: {}]
  %s5 = inlined_call_operand.vmem [shape: f32[30,60], index: 5, kind: input, shape index: {}]
  %s6 = inlined_call_operand.vmem [shape: f32[30,1], index: 6, kind: input, shape index: {}]
  %s7 = inlined_call_operand.vmem [shape: f32[1,30], index: 7, kind: input, shape index: {}]
  %s8 = inlined_call_operand.<no memory space> [shape: f32[1,1], index: 8, kind: input, shape index: {}]
  %s9 = inlined_call_operand.hbm [shape: f32[1,256], index: 9, kind: output, shape index: {}]
  %s10 = sld [smem:[#allocation0]]
  $region46: #{deepnet_forward.1} parent=0
    _
  %s12 = ssub.s32 1, %s10
  %s13 = scalar_select 0, %s12, %s10
  %v14 = vstv %s8
  %15 = vst [vmem:[#allocation2] sm:$0x1] %v14
  $region1: #{deepnet_forward.1} parent=0
    #allocation3 [shape = 'u8[1024]{0}', space=vmem, size = 0x400, scoped, tag = 'output window, operand 0, single buffered']
    #allocation4 [shape = 's32[1]{0}', space=sflag, size = 0x4, scoped, tag = 'scoped memory for deepnet_forward.1']
    %16 = vsyncpa [#allocation4], 0
    // Predicated region
    $region2: #{deepnet_forward.1} parent=1 // pred_check
      _
    $region3: #{deepnet_forward.1} parent=1 // pred_check_branch
      %18 = sbr.rel (0) target = $region5
    $region4: #{deepnet_forward.1} parent=1 // pred_region
      _
    $region5: #{deepnet_forward.1} parent=1 // pred_fallthru
      _
    // Predicated region
    $region6: #{deepnet_forward.1} parent=1 // pred_check
      _
    $region7: #{deepnet_forward.1} parent=1 // pred_check_branch
      %20 = sbr.rel (0) target = $region9
    $region8: #{deepnet_forward.1} parent=1 // pred_region
      _
    $region9: #{deepnet_forward.1} parent=1 // pred_fallthru
      _
    // Predicated region
    $region10: #{deepnet_forward.1} parent=1 // pred_check
      _
    $region11: #{deepnet_forward.1} parent=1 // pred_check_branch
      %22 = sbr.rel (0) target = $region13
    $region12: #{deepnet_forward.1} parent=1 // pred_region
      _
    $region13: #{deepnet_forward.1} parent=1 // pred_fallthru
      _
    // Predicated region
    $region14: #{deepnet_forward.1} parent=1 // pred_check
      _
    $region15: #{deepnet_forward.1} parent=1 // pred_check_branch
      %24 = sbr.rel (0) target = $region17
    $region16: #{deepnet_forward.1} parent=1 // pred_region
      _
    $region17: #{deepnet_forward.1} parent=1 // pred_fallthru
      _
    // Predicated region
    $region18: #{deepnet_forward.1} parent=1 // pred_check
      _
    $region19: #{deepnet_forward.1} parent=1 // pred_check_branch
      %26 = sbr.rel (0) target = $region21
    $region20: #{deepnet_forward.1} parent=1 // pred_region
      _
    $region21: #{deepnet_forward.1} parent=1 // pred_fallthru
      _
    // Predicated region
    $region22: #{deepnet_forward.1} parent=1 // pred_check
      _
    $region23: #{deepnet_forward.1} parent=1 // pred_check_branch
      %28 = sbr.rel (0) target = $region25
    $region24: #{deepnet_forward.1} parent=1 // pred_region
      _
    $region25: #{deepnet_forward.1} parent=1 // pred_fallthru
      _
    // Predicated region
    $region26: #{deepnet_forward.1} parent=1 // pred_check
      _
    $region27: #{deepnet_forward.1} parent=1 // pred_check_branch
      %30 = sbr.rel (0) target = $region29
    $region28: #{deepnet_forward.1} parent=1 // pred_region
      _
    $region29: #{deepnet_forward.1} parent=1 // pred_fallthru
      _
    // Predicated region
    $region30: #{deepnet_forward.1} parent=1 // pred_check
      _
    $region31: #{deepnet_forward.1} parent=1 // pred_check_branch
      %32 = sbr.rel (0) target = $region33
    $region32: #{deepnet_forward.1} parent=1 // pred_region
      _
    $region33: #{deepnet_forward.1} parent=1 // pred_fallthru
      _
    // Predicated region
    $region34: #{deepnet_forward.1} parent=1 // pred_check
      _
    $region35: #{deepnet_forward.1} parent=1 // pred_check_branch
      %34 = sbr.rel (0) target = $region37
    $region36: #{deepnet_forward.1} parent=1 // pred_region
      _
    $region37: #{deepnet_forward.1} parent=1 // pred_fallthru
      _
    %v35 = vld [vmem:[%s1] sm:$0xff]
    %v36 = vld [vmem:[%s1 + $0x8] sm:$0xff]
    %v37 = vld [vmem:[%s1 + $0x10] sm:$0xff]
    %v38 = vld [vmem:[%s1 + $0x18] sm:$0xff]
    %v39 = vld [vmem:[%s1 + $0x20] sm:$0xff]
    %v40 = vld [vmem:[%s1 + $0x28] sm:$0xff]
    %v41 = vld [vmem:[%s1 + $0x30] sm:$0xff]
    %v42 = vld [vmem:[%s1 + $0x38] sm:$0xf]
    %v43 = vld [vmem:[%s0] sm:$0xff]
    %v44 = vld [vmem:[%s0 + $0x8] sm:$0xff]
    %v45 = vld [vmem:[%s2] sm:$0xff]
    %v46 = vld [vmem:[%s2 + $0x8] sm:$0xff]
    %v47 = vld [vmem:[%s2 + $0x10] sm:$0xff]
    %v48 = vld [vmem:[%s2 + $0x18] sm:$0xff]
    %v49 = vld [vmem:[%s2 + $0x20] sm:$0xff]
    %v50 = vld [vmem:[%s2 + $0x28] sm:$0xff]
    %v51 = vld [vmem:[%s2 + $0x30] sm:$0xff]
    %v52 = vld [vmem:[%s2 + $0x38] sm:$0xf]
    %54 = vset.pattern.permute.xlu0 0
    %55 = vperm.xlu0 %54, %v45
    %v56 = vpop.permute.xlu0 %55
    %59 = vset.pattern.permute.xlu0 0
    %60 = vperm.xlu0 %59, %v46
    %v61 = vpop.permute.xlu0 %60
    %64 = vset.pattern.permute.xlu0 0
    %65 = vperm.xlu0 %64, %v47
    %v66 = vpop.permute.xlu0 %65
    %69 = vset.pattern.permute.xlu0 0
    %70 = vperm.xlu0 %69, %v48
    %v71 = vpop.permute.xlu0 %70
    %74 = vset.pattern.permute.xlu0 0
    %75 = vperm.xlu0 %74, %v49
    %v76 = vpop.permute.xlu0 %75
    %79 = vset.pattern.permute.xlu0 0
    %80 = vperm.xlu0 %79, %v50
    %v81 = vpop.permute.xlu0 %80
    %84 = vset.pattern.permute.xlu0 0
    %85 = vperm.xlu0 %84, %v51
    %v86 = vpop.permute.xlu0 %85
    %89 = vset.pattern.permute.xlu0 0
    %90 = vperm.xlu0 %89, %v52
    %v91 = vpop.permute.xlu0 %90
    %vm93 = vcmask 64512
    %v95 = vsel %vm93, %v35, 0
    %v98 = vsel %vm93, %v36, 0
    %v101 = vsel %vm93, %v37, 0
    %v104 = vsel %vm93, %v38, 0
    %v107 = vsel %vm93, %v39, 0
    %v110 = vsel %vm93, %v40, 0
    %v113 = vsel %vm93, %v41, 0
    %v116 = vsel %vm93, %v42, 0
    %118 = vmatprep.subr.mxu0 %v44
    %119 = vmatpush1.msra.mxu0 %v43
    %120 = vmatprep.subr.mxu0 0.0
    %121 = vmatpush1.msra.mxu0 0.0
    %122 = vmatprep.subr.mxu0 0.0
    %123 = vmatpush1.msra.mxu0 0.0
    %124 = vmatprep.subr.mxu0 0.0
    %125 = vmatpush1.msra.mxu0 0.0
    %126 = vmatprep.subr.mxu0 0.0
    %127 = vmatpush1.msra.mxu0 0.0
    %128 = vmatprep.subr.mxu0 0.0
    %129 = vmatpush1.msra.mxu0 0.0
    %130 = vmatprep.subr.mxu0 0.0
    %131 = vmatpush1.msra.mxu0 0.0
    %132 = vmatprep.subr.mxu0 0.0
    %133 = vmatpush1.msra.mxu0 0.0
    %134 = vmatprep.subr.mxu0 0.0
    %135 = vmatpush1.msra.mxu0 0.0
    %136 = vmatprep.subr.mxu0 0.0
    %137 = vmatpush1.msra.mxu0 0.0
    %138 = vmatprep.subr.mxu0 0.0
    %139 = vmatpush1.msra.mxu0 0.0
    %140 = vmatprep.subr.mxu0 0.0
    %141 = vmatpush1.msra.mxu0 0.0
    %142 = vmatprep.subr.mxu0 0.0
    %143 = vmatpush1.msra.mxu0 0.0
    %144 = vmatprep.subr.mxu0 0.0
    %145 = vmatpush1.msra.mxu0 0.0
    %146 = vmatprep.subr.mxu0 0.0
    %147 = vmatpush1.msra.mxu0 0.0
    %148 = vmatprep.subr.mxu0 0.0
    %149 = vmatpush1.msra.mxu0 0.0
    %150 = vmatprep.subr.mxu0 0.0
    %151 = vmatpush1.msra.mxu0 0.0
    %152 = vmatprep.subr.mxu0 0.0
    %153 = vmatpush1.msra.mxu0 0.0
    %154 = vmatprep.subr.mxu0 0.0
    %155 = vmatpush1.msra.mxu0 0.0
    %156 = vmatprep.subr.mxu0 0.0
    %157 = vmatpush1.msra.mxu0 0.0
    %158 = vmatprep.subr.mxu0 0.0
    %159 = vmatpush1.msra.mxu0 0.0
    %160 = vmatprep.subr.mxu0 0.0
    %161 = vmatpush1.msra.mxu0 0.0
    %162 = vmatprep.subr.mxu0 0.0
    %163 = vmatpush1.msra.mxu0 0.0
    %164 = vmatprep.subr.mxu0 0.0
    %165 = vmatpush1.msra.mxu0 0.0
    %166 = vmatprep.subr.mxu0 0.0
    %167 = vmatpush1.msra.mxu0 0.0
    %168 = vmatprep.subr.mxu0 0.0
    %169 = vmatpush1.msra.mxu0 0.0
    %170 = vmatprep.subr.mxu0 0.0
    %171 = vmatpush1.msra.mxu0 0.0
    %172 = vmatprep.subr.mxu0 0.0
    %173 = vmatpush1.msra.mxu0 0.0
    %174 = vmatprep.subr.mxu0 0.0
    %175 = vmatpush1.msra.mxu0 0.0
    %176 = vmatprep.subr.mxu0 0.0
    %177 = vmatpush1.msra.mxu0 0.0
    %178 = vmatprep.subr.mxu0 0.0
    %179 = vmatpush1.msra.mxu0 0.0
    %180 = vmatprep.subr.mxu0 0.0
    %181 = vmatpush1.msra.mxu0 0.0
    %182 = vmatprep.mubr.f32.mxu0 0.0
    %183 = vmatmul.mubr.f32.gmra.mrb[0].mxu0 %v95
    %v184 = vpop.f32.mrb[0].mxu0
    %v185 = vadd.f32 %v56, %v184
    %v186 = vpop.f32.mrb[0].mxu0
    %v187 = vadd.f32 %v56, %v186
    %188 = vmatprep.mubr.f32.mxu0 0.0
    %189 = vmatmul.mubr.f32.gmra.mrb[0].mxu0 %v98
    %v190 = vpop.f32.mrb[0].mxu0
    %v191 = vadd.f32 %v61, %v190
    %v192 = vpop.f32.mrb[0].mxu0
    %v193 = vadd.f32 %v61, %v192
    %194 = vmatprep.mubr.f32.mxu0 0.0
    %195 = vmatmul.mubr.f32.gmra.mrb[0].mxu0 %v101
    %v196 = vpop.f32.mrb[0].mxu0
    %v197 = vadd.f32 %v66, %v196
    %v198 = vpop.f32.mrb[0].mxu0
    %v199 = vadd.f32 %v66, %v198
    %200 = vmatprep.mubr.f32.mxu0 0.0
    %201 = vmatmul.mubr.f32.gmra.mrb[0].mxu0 %v104
    %v202 = vpop.f32.mrb[0].mxu0
    %v203 = vadd.f32 %v71, %v202
    %v204 = vpop.f32.mrb[0].mxu0
    %v205 = vadd.f32 %v71, %v204
    %206 = vmatprep.mubr.f32.mxu0 0.0
    %207 = vmatmul.mubr.f32.gmra.mrb[0].mxu0 %v107
    %v208 = vpop.f32.mrb[0].mxu0
    %v209 = vadd.f32 %v76, %v208
    %v210 = vpop.f32.mrb[0].mxu0
    %v211 = vadd.f32 %v76, %v210
    %212 = vmatprep.mubr.f32.mxu0 0.0
    %213 = vmatmul.mubr.f32.gmra.mrb[0].mxu0 %v110
    %v214 = vpop.f32.mrb[0].mxu0
    %v215 = vadd.f32 %v81, %v214
    %v216 = vpop.f32.mrb[0].mxu0
    %v217 = vadd.f32 %v81, %v216
    %218 = vmatprep.mubr.f32.mxu0 0.0
    %219 = vmatmul.mubr.f32.gmra.mrb[0].mxu0 %v113
    %v220 = vpop.f32.mrb[0].mxu0
    %v221 = vadd.f32 %v86, %v220
    %v222 = vpop.f32.mrb[0].mxu0
    %v223 = vadd.f32 %v86, %v222
    %224 = vmatprep.mubr.f32.mxu0 0.0
    %225 = vmatmul.mubr.f32.gmra.mrb[0].mxu0 %v116
    %v226 = vpop.f32.mrb[0].mxu0
    %v227 = vadd.f32 %v91, %v226
    %v228 = vpop.f32.mrb[0].mxu0
    %v229 = vadd.f32 %v91, %v228
    %230 = vdwg.mxu0
    %vm231 = vcmp.ge.f32.partialorder %v185, 0.0
    %vm232 = vcmp.ge.f32.partialorder %v187, 0.0
    %vm233 = vcmp.ge.f32.partialorder %v191, 0.0
    %vm234 = vcmp.ge.f32.partialorder %v193, 0.0
    %vm235 = vcmp.ge.f32.partialorder %v197, 0.0
    %vm236 = vcmp.ge.f32.partialorder %v199, 0.0
    %vm237 = vcmp.ge.f32.partialorder %v203, 0.0
    %vm238 = vcmp.ge.f32.partialorder %v205, 0.0
    %vm239 = vcmp.ge.f32.partialorder %v209, 0.0
    %vm240 = vcmp.ge.f32.partialorder %v211, 0.0
    %vm241 = vcmp.ge.f32.partialorder %v215, 0.0
    %vm242 = vcmp.ge.f32.partialorder %v217, 0.0
    %vm243 = vcmp.ge.f32.partialorder %v221, 0.0
    %vm244 = vcmp.ge.f32.partialorder %v223, 0.0
    %vm245 = vcmp.ge.f32.partialorder %v227, 0.0
    %vm246 = vcmp.ge.f32.partialorder %v229, 0.0
    %v247 = vmul.f32 %v185, 0.01
    %v248 = vmul.f32 %v187, 0.01
    %v249 = vmul.f32 %v191, 0.01
    %v250 = vmul.f32 %v193, 0.01
    %v251 = vmul.f32 %v197, 0.01
    %v252 = vmul.f32 %v199, 0.01
    %v253 = vmul.f32 %v203, 0.01
    %v254 = vmul.f32 %v205, 0.01
    %v255 = vmul.f32 %v209, 0.01
    %v256 = vmul.f32 %v211, 0.01
    %v257 = vmul.f32 %v215, 0.01
    %v258 = vmul.f32 %v217, 0.01
    %v259 = vmul.f32 %v221, 0.01
    %v260 = vmul.f32 %v223, 0.01
    %v261 = vmul.f32 %v227, 0.01
    %v262 = vmul.f32 %v229, 0.01
    %v263 = vsel %vm231, %v185, %v247
    %v264 = vsel %vm232, %v187, %v248
    %v265 = vsel %vm233, %v191, %v249
    %v266 = vsel %vm234, %v193, %v250
    %v267 = vsel %vm235, %v197, %v251
    %v268 = vsel %vm236, %v199, %v252
    %v269 = vsel %vm237, %v203, %v253
    %v270 = vsel %vm238, %v205, %v254
    %v271 = vsel %vm239, %v209, %v255
    %v272 = vsel %vm240, %v211, %v256
    %v273 = vsel %vm241, %v215, %v257
    %v274 = vsel %vm242, %v217, %v258
    %v275 = vsel %vm243, %v221, %v259
    %v276 = vsel %vm244, %v223, %v260
    %v277 = vsel %vm245, %v227, %v261
    %v278 = vsel %vm246, %v229, %v262
    %v279 = vld [vmem:[%s3] sm:$0xff]
    %v280 = vld [vmem:[%s3 + $0x8] sm:$0xff]
    %v281 = vld [vmem:[%s3 + $0x10] sm:$0xff]
    %v282 = vld [vmem:[%s3 + $0x18] sm:$0xff]
    %v283 = vld [vmem:[%s3 + $0x20] sm:$0xff]
    %v284 = vld [vmem:[%s3 + $0x28] sm:$0xff]
    %v285 = vld [vmem:[%s3 + $0x30] sm:$0xff]
    %v286 = vld [vmem:[%s3 + $0x38] sm:$0xf]
    %v287 = vld [vmem:[%s4] sm:$0xff]
    %v288 = vld [vmem:[%s4 + $0x8] sm:$0xff]
    %v289 = vld [vmem:[%s4 + $0x10] sm:$0xff]
    %v290 = vld [vmem:[%s4 + $0x18] sm:$0xff]
    %v291 = vld [vmem:[%s4 + $0x20] sm:$0xff]
    %v292 = vld [vmem:[%s4 + $0x28] sm:$0xff]
    %v293 = vld [vmem:[%s4 + $0x30] sm:$0xff]
    %v294 = vld [vmem:[%s4 + $0x38] sm:$0xf]
    %296 = vset.pattern.permute.xlu0 0
    %297 = vperm.xlu0 %296, %v287
    %v298 = vpop.permute.xlu0 %297
    %301 = vset.pattern.permute.xlu0 0
    %302 = vperm.xlu0 %301, %v288
    %v303 = vpop.permute.xlu0 %302
    %306 = vset.pattern.permute.xlu0 0
    %307 = vperm.xlu0 %306, %v289
    %v308 = vpop.permute.xlu0 %307
    %311 = vset.pattern.permute.xlu0 0
    %312 = vperm.xlu0 %311, %v290
    %v313 = vpop.permute.xlu0 %312
    %316 = vset.pattern.permute.xlu0 0
    %317 = vperm.xlu0 %316, %v291
    %v318 = vpop.permute.xlu0 %317
    %321 = vset.pattern.permute.xlu0 0
    %322 = vperm.xlu0 %321, %v292
    %v323 = vpop.permute.xlu0 %322
    %326 = vset.pattern.permute.xlu0 0
    %327 = vperm.xlu0 %326, %v293
    %v328 = vpop.permute.xlu0 %327
    %331 = vset.pattern.permute.xlu0 0
    %332 = vperm.xlu0 %331, %v294
    %v333 = vpop.permute.xlu0 %332
    %vm335 = vcmask 490496
    %v337 = vsel %vm335, %v279, 0
    %v340 = vsel %vm335, %v280, 0
    %v343 = vsel %vm335, %v281, 0
    %v346 = vsel %vm335, %v282, 0
    %v349 = vsel %vm335, %v283, 0
    %v352 = vsel %vm335, %v284, 0
    %v355 = vsel %vm335, %v285, 0
    %v358 = vsel %vm335, %v286, 0
    %vm360 = vcmask 1043456
    %v362 = vsel %vm360, %v277, 0
    %v365 = vsel %vm360, %v278, 0
    %367 = vmatprep.subr.mxu0 %v264
    %368 = vmatpush1.msra.mxu0 %v263
    %369 = vmatprep.subr.mxu0 %v266
    %370 = vmatpush1.msra.mxu0 %v265
    %371 = vmatprep.subr.mxu0 %v268
    %372 = vmatpush1.msra.mxu0 %v267
    %373 = vmatprep.subr.mxu0 %v270
    %374 = vmatpush1.msra.mxu0 %v269
    %375 = vmatprep.subr.mxu0 %v272
    %376 = vmatpush1.msra.mxu0 %v271
    %377 = vmatprep.subr.mxu0 %v274
    %378 = vmatpush1.msra.mxu0 %v273
    %379 = vmatprep.subr.mxu0 %v276
    %380 = vmatpush1.msra.mxu0 %v275
    %381 = vmatprep.subr.mxu0 %v365
    %382 = vmatpush1.msra.mxu0 %v362
    %383 = vmatprep.subr.mxu0 0.0
    %384 = vmatpush1.msra.mxu0 0.0
    %385 = vmatprep.subr.mxu0 0.0
    %386 = vmatpush1.msra.mxu0 0.0
    %387 = vmatprep.subr.mxu0 0.0
    %388 = vmatpush1.msra.mxu0 0.0
    %389 = vmatprep.subr.mxu0 0.0
    %390 = vmatpush1.msra.mxu0 0.0
    %391 = vmatprep.subr.mxu0 0.0
    %392 = vmatpush1.msra.mxu0 0.0
    %393 = vmatprep.subr.mxu0 0.0
    %394 = vmatpush1.msra.mxu0 0.0
    %395 = vmatprep.subr.mxu0 0.0
    %396 = vmatpush1.msra.mxu0 0.0
    %397 = vmatprep.subr.mxu0 0.0
    %398 = vmatpush1.msra.mxu0 0.0
    %399 = vmatprep.subr.mxu0 0.0
    %400 = vmatpush1.msra.mxu0 0.0
    %401 = vmatprep.subr.mxu0 0.0
    %402 = vmatpush1.msra.mxu0 0.0
    %403 = vmatprep.subr.mxu0 0.0
    %404 = vmatpush1.msra.mxu0 0.0
    %405 = vmatprep.subr.mxu0 0.0
    %406 = vmatpush1.msra.mxu0 0.0
    %407 = vmatprep.subr.mxu0 0.0
    %408 = vmatpush1.msra.mxu0 0.0
    %409 = vmatprep.subr.mxu0 0.0
    %410 = vmatpush1.msra.mxu0 0.0
    %411 = vmatprep.subr.mxu0 0.0
    %412 = vmatpush1.msra.mxu0 0.0
    %413 = vmatprep.subr.mxu0 0.0
    %414 = vmatpush1.msra.mxu0 0.0
    %415 = vmatprep.subr.mxu0 0.0
    %416 = vmatpush1.msra.mxu0 0.0
    %417 = vmatprep.subr.mxu0 0.0
    %418 = vmatpush1.msra.mxu0 0.0
    %419 = vmatprep.subr.mxu0 0.0
    %420 = vmatpush1.msra.mxu0 0.0
    %421 = vmatprep.subr.mxu0 0.0
    %422 = vmatpush1.msra.mxu0 0.0
    %423 = vmatprep.subr.mxu0 0.0
    %424 = vmatpush1.msra.mxu0 0.0
    %425 = vmatprep.subr.mxu0 0.0
    %426 = vmatpush1.msra.mxu0 0.0
    %427 = vmatprep.subr.mxu0 0.0
    %428 = vmatpush1.msra.mxu0 0.0
    %429 = vmatprep.subr.mxu0 0.0
    %430 = vmatpush1.msra.mxu0 0.0
    %431 = vmatprep.mubr.f32.mxu0 0.0
    %432 = vmatmul.mubr.f32.gmra.mrb[0].mxu0 %v337
    %v433 = vpop.f32.mrb[0].mxu0
    %v434 = vadd.f32 %v298, %v433
    %v435 = vpop.f32.mrb[0].mxu0
    %v436 = vadd.f32 %v298, %v435
    %437 = vmatprep.mubr.f32.mxu0 0.0
    %438 = vmatmul.mubr.f32.gmra.mrb[0].mxu0 %v340
    %v439 = vpop.f32.mrb[0].mxu0
    %v440 = vadd.f32 %v303, %v439
    %v441 = vpop.f32.mrb[0].mxu0
    %v442 = vadd.f32 %v303, %v441
    %443 = vmatprep.mubr.f32.mxu0 0.0
    %444 = vmatmul.mubr.f32.gmra.mrb[0].mxu0 %v343
    %v445 = vpop.f32.mrb[0].mxu0
    %v446 = vadd.f32 %v308, %v445
    %v447 = vpop.f32.mrb[0].mxu0
    %v448 = vadd.f32 %v308, %v447
    %449 = vmatprep.mubr.f32.mxu0 0.0
    %450 = vmatmul.mubr.f32.gmra.mrb[0].mxu0 %v346
    %v451 = vpop.f32.mrb[0].mxu0
    %v452 = vadd.f32 %v313, %v451
    %v453 = vpop.f32.mrb[0].mxu0
    %v454 = vadd.f32 %v313, %v453
    %455 = vmatprep.mubr.f32.mxu0 0.0
    %456 = vmatmul.mubr.f32.gmra.mrb[0].mxu0 %v349
    %v457 = vpop.f32.mrb[0].mxu0
    %v458 = vadd.f32 %v318, %v457
    %v459 = vpop.f32.mrb[0].mxu0
    %v460 = vadd.f32 %v318, %v459
    %461 = vmatprep.mubr.f32.mxu0 0.0
    %462 = vmatmul.mubr.f32.gmra.mrb[0].mxu0 %v352
    %v463 = vpop.f32.mrb[0].mxu0
    %v464 = vadd.f32 %v323, %v463
    %v465 = vpop.f32.mrb[0].mxu0
    %v466 = vadd.f32 %v323, %v465
    %467 = vmatprep.mubr.f32.mxu0 0.0
    %468 = vmatmul.mubr.f32.gmra.mrb[0].mxu0 %v355
    %v469 = vpop.f32.mrb[0].mxu0
    %v470 = vadd.f32 %v328, %v469
    %v471 = vpop.f32.mrb[0].mxu0
    %v472 = vadd.f32 %v328, %v471
    %473 = vmatprep.mubr.f32.mxu0 0.0
    %474 = vmatmul.mubr.f32.gmra.mrb[0].mxu0 %v358
    %v475 = vpop.f32.mrb[0].mxu0
    %v476 = vadd.f32 %v333, %v475
    %v477 = vpop.f32.mrb[0].mxu0
    %v478 = vadd.f32 %v333, %v477
    %479 = vdwg.mxu0
    %vm480 = vcmp.ge.f32.partialorder %v434, 0.0
    %vm481 = vcmp.ge.f32.partialorder %v436, 0.0
    %vm482 = vcmp.ge.f32.partialorder %v440, 0.0
    %vm483 = vcmp.ge.f32.partialorder %v442, 0.0
    %vm484 = vcmp.ge.f32.partialorder %v446, 0.0
    %vm485 = vcmp.ge.f32.partialorder %v448, 0.0
    %vm486 = vcmp.ge.f32.partialorder %v452, 0.0
    %vm487 = vcmp.ge.f32.partialorder %v454, 0.0
    %vm488 = vcmp.ge.f32.partialorder %v458, 0.0
    %vm489 = vcmp.ge.f32.partialorder %v460, 0.0
    %vm490 = vcmp.ge.f32.partialorder %v464, 0.0
    %vm491 = vcmp.ge.f32.partialorder %v466, 0.0
    %vm492 = vcmp.ge.f32.partialorder %v470, 0.0
    %vm493 = vcmp.ge.f32.partialorder %v472, 0.0
    %vm494 = vcmp.ge.f32.partialorder %v476, 0.0
    %vm495 = vcmp.ge.f32.partialorder %v478, 0.0
    %v496 = vmul.f32 %v434, 0.01
    %v497 = vmul.f32 %v436, 0.01
    %v498 = vmul.f32 %v440, 0.01
    %v499 = vmul.f32 %v442, 0.01
    %v500 = vmul.f32 %v446, 0.01
    %v501 = vmul.f32 %v448, 0.01
    %v502 = vmul.f32 %v452, 0.01
    %v503 = vmul.f32 %v454, 0.01
    %v504 = vmul.f32 %v458, 0.01
    %v505 = vmul.f32 %v460, 0.01
    %v506 = vmul.f32 %v464, 0.01
    %v507 = vmul.f32 %v466, 0.01
    %v508 = vmul.f32 %v470, 0.01
    %v509 = vmul.f32 %v472, 0.01
    %v510 = vmul.f32 %v476, 0.01
    %v511 = vmul.f32 %v478, 0.01
    %v512 = vsel %vm480, %v434, %v496
    %v513 = vsel %vm481, %v436, %v497
    %v514 = vsel %vm482, %v440, %v498
    %v515 = vsel %vm483, %v442, %v499
    %v516 = vsel %vm484, %v446, %v500
    %v517 = vsel %vm485, %v448, %v501
    %v518 = vsel %vm486, %v452, %v502
    %v519 = vsel %vm487, %v454, %v503
    %v520 = vsel %vm488, %v458, %v504
    %v521 = vsel %vm489, %v460, %v505
    %v522 = vsel %vm490, %v464, %v506
    %v523 = vsel %vm491, %v466, %v507
    %v524 = vsel %vm492, %v470, %v508
    %v525 = vsel %vm493, %v472, %v509
    %v526 = vsel %vm494, %v476, %v510
    %v527 = vsel %vm495, %v478, %v511
    %v528 = vld [vmem:[%s5] sm:$0xff]
    %v529 = vld [vmem:[%s5 + $0x8] sm:$0xff]
    %v530 = vld [vmem:[%s5 + $0x10] sm:$0xff]
    %v531 = vld [vmem:[%s5 + $0x18] sm:$0x3f]
    %v532 = vld [vmem:[%s6] sm:$0xff]
    %v533 = vld [vmem:[%s6 + $0x8] sm:$0xff]
    %v534 = vld [vmem:[%s6 + $0x10] sm:$0xff]
    %v535 = vld [vmem:[%s6 + $0x18] sm:$0x3f]
    %537 = vset.pattern.permute.xlu0 0
    %538 = vperm.xlu0 %537, %v532
    %v539 = vpop.permute.xlu0 %538
    %542 = vset.pattern.permute.xlu0 0
    %543 = vperm.xlu0 %542, %v533
    %v544 = vpop.permute.xlu0 %543
    %547 = vset.pattern.permute.xlu0 0
    %548 = vperm.xlu0 %547, %v534
    %v549 = vpop.permute.xlu0 %548
    %552 = vset.pattern.permute.xlu0 0
    %553 = vperm.xlu0 %552, %v535
    %v554 = vpop.permute.xlu0 %553
    %v557 = vsel %vm335, %v528, 0
    %v560 = vsel %vm335, %v529, 0
    %v563 = vsel %vm335, %v530, 0
    %v566 = vsel %vm335, %v531, 0
    %v569 = vsel %vm360, %v526, 0
    %v572 = vsel %vm360, %v527, 0
    %574 = vmatprep.subr.mxu0 %v513
    %575 = vmatpush1.msra.mxu0 %v512
    %576 = vmatprep.subr.mxu0 %v515
    %577 = vmatpush1.msra.mxu0 %v514
    %578 = vmatprep.subr.mxu0 %v517
    %579 = vmatpush1.msra.mxu0 %v516
    %580 = vmatprep.subr.mxu0 %v519
    %581 = vmatpush1.msra.mxu0 %v518
    %582 = vmatprep.subr.mxu0 %v521
    %583 = vmatpush1.msra.mxu0 %v520
    %584 = vmatprep.subr.mxu0 %v523
    %585 = vmatpush1.msra.mxu0 %v522
    %586 = vmatprep.subr.mxu0 %v525
    %587 = vmatpush1.msra.mxu0 %v524
    %588 = vmatprep.subr.mxu0 %v572
    %589 = vmatpush1.msra.mxu0 %v569
    %590 = vmatprep.subr.mxu0 0.0
    %591 = vmatpush1.msra.mxu0 0.0
    %592 = vmatprep.subr.mxu0 0.0
    %593 = vmatpush1.msra.mxu0 0.0
    %594 = vmatprep.subr.mxu0 0.0
    %595 = vmatpush1.msra.mxu0 0.0
    %596 = vmatprep.subr.mxu0 0.0
    %597 = vmatpush1.msra.mxu0 0.0
    %598 = vmatprep.subr.mxu0 0.0
    %599 = vmatpush1.msra.mxu0 0.0
    %600 = vmatprep.subr.mxu0 0.0
    %601 = vmatpush1.msra.mxu0 0.0
    %602 = vmatprep.subr.mxu0 0.0
    %603 = vmatpush1.msra.mxu0 0.0
    %604 = vmatprep.subr.mxu0 0.0
    %605 = vmatpush1.msra.mxu0 0.0
    %606 = vmatprep.subr.mxu0 0.0
    %607 = vmatpush1.msra.mxu0 0.0
    %608 = vmatprep.subr.mxu0 0.0
    %609 = vmatpush1.msra.mxu0 0.0
    %610 = vmatprep.subr.mxu0 0.0
    %611 = vmatpush1.msra.mxu0 0.0
    %612 = vmatprep.subr.mxu0 0.0
    %613 = vmatpush1.msra.mxu0 0.0
    %614 = vmatprep.subr.mxu0 0.0
    %615 = vmatpush1.msra.mxu0 0.0
    %616 = vmatprep.subr.mxu0 0.0
    %617 = vmatpush1.msra.mxu0 0.0
    %618 = vmatprep.subr.mxu0 0.0
    %619 = vmatpush1.msra.mxu0 0.0
    %620 = vmatprep.subr.mxu0 0.0
    %621 = vmatpush1.msra.mxu0 0.0
    %622 = vmatprep.subr.mxu0 0.0
    %623 = vmatpush1.msra.mxu0 0.0
    %624 = vmatprep.subr.mxu0 0.0
    %625 = vmatpush1.msra.mxu0 0.0
    %626 = vmatprep.subr.mxu0 0.0
    %627 = vmatpush1.msra.mxu0 0.0
    %628 = vmatprep.subr.mxu0 0.0
    %629 = vmatpush1.msra.mxu0 0.0
    %630 = vmatprep.subr.mxu0 0.0
    %631 = vmatpush1.msra.mxu0 0.0
    %632 = vmatprep.subr.mxu0 0.0
    %633 = vmatpush1.msra.mxu0 0.0
    %634 = vmatprep.subr.mxu0 0.0
    %635 = vmatpush1.msra.mxu0 0.0
    %636 = vmatprep.subr.mxu0 0.0
    %637 = vmatpush1.msra.mxu0 0.0
    %638 = vmatprep.mubr.f32.mxu0 0.0
    %639 = vmatmul.mubr.f32.gmra.mrb[0].mxu0 %v557
    %v640 = vpop.f32.mrb[0].mxu0
    %v641 = vadd.f32 %v539, %v640
    %v642 = vpop.f32.mrb[0].mxu0
    %v643 = vadd.f32 %v539, %v642
    %644 = vmatprep.mubr.f32.mxu0 0.0
    %645 = vmatmul.mubr.f32.gmra.mrb[0].mxu0 %v560
    %v646 = vpop.f32.mrb[0].mxu0
    %v647 = vadd.f32 %v544, %v646
    %v648 = vpop.f32.mrb[0].mxu0
    %v649 = vadd.f32 %v544, %v648
    %650 = vmatprep.mubr.f32.mxu0 0.0
    %651 = vmatmul.mubr.f32.gmra.mrb[0].mxu0 %v563
    %v652 = vpop.f32.mrb[0].mxu0
    %v653 = vadd.f32 %v549, %v652
    %v654 = vpop.f32.mrb[0].mxu0
    %v655 = vadd.f32 %v549, %v654
    %656 = vmatprep.mubr.f32.mxu0 0.0
    %657 = vmatmul.mubr.f32.gmra.mrb[0].mxu0 %v566
    %v658 = vpop.f32.mrb[0].mxu0
    %v659 = vadd.f32 %v554, %v658
    %v660 = vpop.f32.mrb[0].mxu0
    %v661 = vadd.f32 %v554, %v660
    %662 = vdwg.mxu0
    %vm663 = vcmp.ge.f32.partialorder %v641, 0.0
    %vm664 = vcmp.ge.f32.partialorder %v643, 0.0
    %vm665 = vcmp.ge.f32.partialorder %v647, 0.0
    %vm666 = vcmp.ge.f32.partialorder %v649, 0.0
    %vm667 = vcmp.ge.f32.partialorder %v653, 0.0
    %vm668 = vcmp.ge.f32.partialorder %v655, 0.0
    %vm669 = vcmp.ge.f32.partialorder %v659, 0.0
    %vm670 = vcmp.ge.f32.partialorder %v661, 0.0
    %v671 = vmul.f32 %v641, 0.01
    %v672 = vmul.f32 %v643, 0.01
    %v673 = vmul.f32 %v647, 0.01
    %v674 = vmul.f32 %v649, 0.01
    %v675 = vmul.f32 %v653, 0.01
    %v676 = vmul.f32 %v655, 0.01
    %v677 = vmul.f32 %v659, 0.01
    %v678 = vmul.f32 %v661, 0.01
    %v679 = vsel %vm663, %v641, %v671
    %v680 = vsel %vm664, %v643, %v672
    %v681 = vsel %vm665, %v647, %v673
    %v682 = vsel %vm666, %v649, %v674
    %v683 = vsel %vm667, %v653, %v675
    %v684 = vsel %vm668, %v655, %v676
    %v685 = vsel %vm669, %v659, %v677
    %v686 = vsel %vm670, %v661, %v678
    %v687 = vld [vmem:[%s7] sm:$0x1]
    %v688 = vld [vmem:[#allocation2] sm:$0x1]
    %690 = vset.pattern.permute.xlu0 0
    %691 = vperm.xlu0 %690, %v688
    %v692 = vpop.permute.xlu0 %691
    %v694 = vlaneseq
    %v695 = vshrl.u32 %v694, 7
    %v696 = vsub.s32 0, %v695
    %v697 = vrot.slane %v692, %v696
    %vm698 = vcmask 244736
    %v700 = vsel %vm698, %v687, 0
    %vm702 = vcmask 1045504
    %v704 = vsel %vm702, %v685, 0
    %v707 = vsel %vm702, %v686, 0
    %709 = vmatprep.subr.mxu0 %v680
    %710 = vmatpush1.msra.mxu0 %v679
    %711 = vmatprep.subr.mxu0 %v682
    %712 = vmatpush1.msra.mxu0 %v681
    %713 = vmatprep.subr.mxu0 %v684
    %714 = vmatpush1.msra.mxu0 %v683
    %715 = vmatprep.subr.mxu0 %v707
    %716 = vmatpush1.msra.mxu0 %v704
    %717 = vmatprep.subr.mxu0 0.0
    %718 = vmatpush1.msra.mxu0 0.0
    %719 = vmatprep.subr.mxu0 0.0
    %720 = vmatpush1.msra.mxu0 0.0
    %721 = vmatprep.subr.mxu0 0.0
    %722 = vmatpush1.msra.mxu0 0.0
    %723 = vmatprep.subr.mxu0 0.0
    %724 = vmatpush1.msra.mxu0 0.0
    %725 = vmatprep.subr.mxu0 0.0
    %726 = vmatpush1.msra.mxu0 0.0
    %727 = vmatprep.subr.mxu0 0.0
    %728 = vmatpush1.msra.mxu0 0.0
    %729 = vmatprep.subr.mxu0 0.0
    %730 = vmatpush1.msra.mxu0 0.0
    %731 = vmatprep.subr.mxu0 0.0
    %732 = vmatpush1.msra.mxu0 0.0
    %733 = vmatprep.subr.mxu0 0.0
    %734 = vmatpush1.msra.mxu0 0.0
    %735 = vmatprep.subr.mxu0 0.0
    %736 = vmatpush1.msra.mxu0 0.0
    %737 = vmatprep.subr.mxu0 0.0
    %738 = vmatpush1.msra.mxu0 0.0
    %739 = vmatprep.subr.mxu0 0.0
    %740 = vmatpush1.msra.mxu0 0.0
    %741 = vmatprep.subr.mxu0 0.0
    %742 = vmatpush1.msra.mxu0 0.0
    %743 = vmatprep.subr.mxu0 0.0
    %744 = vmatpush1.msra.mxu0 0.0
    %745 = vmatprep.subr.mxu0 0.0
    %746 = vmatpush1.msra.mxu0 0.0
    %747 = vmatprep.subr.mxu0 0.0
    %748 = vmatpush1.msra.mxu0 0.0
    %749 = vmatprep.subr.mxu0 0.0
    %750 = vmatpush1.msra.mxu0 0.0
    %751 = vmatprep.subr.mxu0 0.0
    %752 = vmatpush1.msra.mxu0 0.0
    %753 = vmatprep.subr.mxu0 0.0
    %754 = vmatpush1.msra.mxu0 0.0
    %755 = vmatprep.subr.mxu0 0.0
    %756 = vmatpush1.msra.mxu0 0.0
    %757 = vmatprep.subr.mxu0 0.0
    %758 = vmatpush1.msra.mxu0 0.0
    %759 = vmatprep.subr.mxu0 0.0
    %760 = vmatpush1.msra.mxu0 0.0
    %761 = vmatprep.subr.mxu0 0.0
    %762 = vmatpush1.msra.mxu0 0.0
    %763 = vmatprep.subr.mxu0 0.0
    %764 = vmatpush1.msra.mxu0 0.0
    %765 = vmatprep.subr.mxu0 0.0
    %766 = vmatpush1.msra.mxu0 0.0
    %767 = vmatprep.subr.mxu0 0.0
    %768 = vmatpush1.msra.mxu0 0.0
    %769 = vmatprep.subr.mxu0 0.0
    %770 = vmatpush1.msra.mxu0 0.0
    %771 = vmatprep.subr.mxu0 0.0
    %772 = vmatpush1.msra.mxu0 0.0
    %773 = vmatprep.mubr.f32.mxu0 0.0
    %774 = vmatmul.mubr.f32.gmra.mrb[0].mxu0 %v700
    %v775 = vpop.f32.mrb[0].mxu0
    %v776 = vadd.f32 %v697, %v775
    %v777 = vpop.f32.mrb[0].mxu0
    %v778 = vadd.f32 %v697, %v777
    %779 = vdwg.mxu0
    %v782 = vcombine.low %v776, %v778
    %v784 = vunpack.c.l.s4 1966171168
    %v785 = vunpack.c.0.s8 %v784
    %v786 = vlaneseq
    %v787 = vshrl.u32 %v786, 7
    %v788 = vsub.s32 %v785, %v787
    %v789 = vrot.slane %v782, %v788
    %v791 = vunpack.c.l.s4 1966171168
    %v792 = vunpack.c.0.s8 %v791
    %v793 = vlaneseq
    %v794 = vshrl.u32 %v793, 7
    %v795 = vsub.s32 %v792, %v794
    %v796 = vrot.slane %v789, %v795
    %v798 = vlaneseq
    %vm799 = vcmp.ge.s32.totalorder %v798, 0
    %vm800 = vcmp.lt.s32.totalorder %v798, 256
    %vm801 = vmand %vm799, %vm800
    %802 = vst.msk [vmem:[#allocation3] sm:$0x3] %vm801, %v796
    // Predicated region
    $region38: #{deepnet_forward.1} parent=1 // pred_check
      _
    $region39: #{deepnet_forward.1} parent=1 // pred_check_branch
      %804 = sbr.rel (0) target = $region41
    $region40: #{deepnet_forward.1} parent=1 // pred_region
      %s806 = ssub.s32 32, 32
      %807 = vsyncadd [#allocation4], %s806
      %s809 = sshll.u32 [#allocation3], 4
      %s810 = int_to_ptr.vmem [resolvable:$true] %s809
      %812 = dma.vmem_to_hbm [thread:$0]  %s810, 32, %s9, [#allocation4]
    $region41: #{deepnet_forward.1} parent=1 // pred_fallthru
      _
    // Predicated region
    $region42: #{deepnet_forward.1} parent=1 // pred_check
      _
    $region43: #{deepnet_forward.1} parent=1 // pred_check_branch
      %814 = sbr.rel (0) target = $region45
    $region44: #{deepnet_forward.1} parent=1 // pred_region
      %815 = dma.done [#allocation4], 32
    $region45: #{deepnet_forward.1} parent=1 // pred_fallthru
      _
    %816 = vsyncpa [#allocation4], 1

</llo_original>
